<compile_context>
chip_gen: v6e
topology: v6e:2x2x1
jax: 0.10.0
libtpu: 0.0.40
codegen_flags: <defaults>
</compile_context>

<pallas_src>
import math
import numpy as np
import jax
import jax.numpy as jnp
from jax.experimental import pallas as pl
from jax.experimental.pallas import tpu as pltpu


def _adaptive_pool_matrix(in_size: int, out_size: int) -> np.ndarray:
    """Row i averages input range [floor(i*in/out), ceil((i+1)*in/out)) — matches
    torch.nn.functional.adaptive_avg_pool2d bin edges exactly."""
    M = np.zeros((out_size, in_size), dtype=np.float32)
    for i in range(out_size):
        start = (i * in_size) // out_size
        end = math.ceil((i + 1) * in_size / out_size)
        M[i, start:end] = 1.0 / (end - start)
    return M


def _build_pool_matrices(seed, cutn, cut_pow, cut_size, sideY, sideX):
    """Host-side RNG + averaging-matrix construction (vectorized numpy RNG,
    no device syncs). Returns ry (cutn, cs, H) and rx^T (cutn, W, cs), f32."""
    cs = int(cut_size)
    max_size = min(sideX, sideY)
    min_size = min(sideX, sideY, cs)

    rng = np.random.default_rng(seed)
    u = rng.random(cutn)
    sizes = (u ** cut_pow * (max_size - min_size) + min_size).astype(np.int64)
    offx = rng.integers(0, sideX - sizes + 1)   # exclusive high, same as torch.randint
    offy = rng.integers(0, sideY - sizes + 1)

    ry = np.zeros((cutn, cs, sideY), dtype=np.float32)
    rxT = np.zeros((cutn, sideX, cs), dtype=np.float32)   # pre-transposed (W, cs)
    for k in range(cutn):
        s, oy, ox = int(sizes[k]), int(offy[k]), int(offx[k])
        P = _adaptive_pool_matrix(s, cs)
        ry[k, :, oy:oy + s] = P
        rxT[k, ox:ox + s, :] = P.T
    return ry, rxT


def make_cutouts(x, cut_size, cutn, cut_pow=1.0, seed=0):
    """x: (N, C, H, W) float32. Returns (cutn*N, C, cut_size, cut_size) float32."""
    N, C, sideY, sideX = map(int, x.shape)
    NC = N * C
    cs = int(cut_size)

    ry_np, rxT_np = _build_pool_matrices(seed, cutn, cut_pow, cs, sideY, sideX)

    # bf16 inputs for the MXU (accumulation stays f32 inside the kernel).
    ry = jnp.asarray(ry_np, dtype=jnp.bfloat16)          # (cutn, cs, H)
    rxT = jnp.asarray(rxT_np, dtype=jnp.bfloat16)        # (cutn, W, cs)
    # Lay x out as (H, N*C*W): one XLA transpose, reused by every grid step.
    x_flat = (x.astype(jnp.bfloat16)
                .reshape(NC, sideY, sideX)
                .transpose(1, 0, 2)
                .reshape(sideY, NC * sideX))

    def kernel(ry_ref, rx_ref, x_ref, o_ref, t_ref):
        ry_k = ry_ref[0]          # (cs, H)    bf16
        rxT_k = rx_ref[0]         # (W, cs)    bf16
        xk = x_ref[...]           # (H, NC*W)  bf16
        # Stage 1: single MXU matmul over the whole image batch.
        tmp = jnp.dot(ry_k, xk, preferred_element_type=jnp.float32)   # (cs, NC*W) f32
        # Re-layout (cs, NC*W) -> (NC*cs, W): NC contiguous sublane block stores
        # into a VMEM scratch (row block n*cs:(n+1)*cs  <-  lane slice n*W:(n+1)*W).
        for n in range(NC):
            t_ref[n * cs:(n + 1) * cs, :] = tmp[:, n * sideX:(n + 1) * sideX]
        # Stage 2: single MXU matmul; rhs is already (W, cs) so the contraction
        # dim is leading (no trans-B lowering).
        out = jnp.dot(t_ref[...].astype(jnp.bfloat16), rxT_k,
                      preferred_element_type=jnp.float32)              # (NC*cs, cs)
        o_ref[...] = out[None].astype(o_ref.dtype)

    grid_spec = pltpu.PrefetchScalarGridSpec(
        num_scalar_prefetch=0,
        grid=(cutn,),
        in_specs=[
            pl.BlockSpec((1, cs, sideY), lambda k: (k, 0, 0)),        # ry
            pl.BlockSpec((1, sideX, cs), lambda k: (k, 0, 0)),        # rx^T
            pl.BlockSpec((sideY, NC * sideX), lambda k: (0, 0)),      # x (grid-invariant)
        ],
        out_specs=pl.BlockSpec((1, NC * cs, cs), lambda k: (k, 0, 0)),
        scratch_shapes=[pltpu.VMEM((NC * cs, sideX), jnp.float32)],
    )

    # VMEM budget (double-buffered pipeline blocks + scratch) and cost hint.
    vmem_needed = (2 * sideY * NC * sideX * 2      # x block
                   + 2 * cs * sideY * 2            # ry block
                   + 2 * sideX * cs * 2            # rx^T block
                   + 2 * NC * cs * cs * 4          # out block
                   + NC * cs * sideX * 4)          # relayout scratch
    vmem_limit = int(min(max(vmem_needed + (4 << 20), 16 << 20), 64 << 20))

    flops = 2 * cutn * (cs * sideY * NC * sideX + NC * cs * sideX * cs)
    bytes_accessed = (sideY * NC * sideX * 2
                      + cutn * (cs * sideY + sideX * cs) * 2
                      + cutn * NC * cs * cs * 4)

    out = pl.pallas_call(
        kernel,
        out_shape=jax.ShapeDtypeStruct((cutn, NC * cs, cs), jnp.float32),
        grid_spec=grid_spec,
        compiler_params=pltpu.CompilerParams(
            dimension_semantics=("parallel",),
            vmem_limit_bytes=vmem_limit,
        ),
        cost_estimate=pl.CostEstimate(flops=flops, transcendentals=0,
                                      bytes_accessed=bytes_accessed),
    )(ry, rxT, x_flat)

    # Rows are ordered (n*C + c, s) per cutout -> free reshape back to NCHW cutouts.
    return out.reshape(cutn * N, C, cs, cs)


if __name__ == "__main__":
    N, C, H, W = 2, 4, 16, 16
    cut_size, cutn, cut_pow = 8, 4, 1.0

    x = jax.random.normal(jax.random.PRNGKey(0), (N, C, H, W), dtype=jnp.float32)

    out = make_cutouts(x, cut_size, cutn, cut_pow, seed=0)
    out = jax.block_until_ready(out)

    assert out.shape == (cutn * N, C, cut_size, cut_size), out.shape
    assert out.dtype == jnp.float32
    assert bool(jnp.all(jnp.isfinite(out)))

    # Pure-JAX reference with the same bf16-quantized inputs (loose tolerance for
    # the bf16 intermediate cast inside the kernel).
    ry_np, rxT_np = _build_pool_matrices(0, cutn, cut_pow, cut_size, H, W)
    xq = x.astype(jnp.bfloat16).astype(jnp.float32).reshape(N * C, H, W)
    ryf = jnp.asarray(ry_np, jnp.bfloat16).astype(jnp.float32)
    rxf = jnp.asarray(rxT_np, jnp.bfloat16).astype(jnp.float32)
    ref = jnp.einsum('ksh,nhw,kwt->knst', ryf, xq, rxf)
    ref = ref.reshape(cutn * N, C, cut_size, cut_size)
    assert bool(jnp.allclose(out, ref, rtol=5e-2, atol=5e-2)), \
        float(jnp.max(jnp.abs(out - ref)))

    print("KERNEL_OK")
</pallas_src>

<mosaic_0001>
module attributes {stable_mosaic.version = 11 : i64} {
  func.func @kernel(%arg0: i32, %arg1: memref<1x8x16xbf16, #tpu.memory_space<vmem>>, %arg2: memref<1x16x8xbf16, #tpu.memory_space<vmem>>, %arg3: memref<16x128xbf16, #tpu.memory_space<vmem>>, %arg4: memref<1x64x8xf32, #tpu.memory_space<vmem>>, %arg5: memref<64x16xf32, #tpu.memory_space<vmem>>) attributes {dimension_semantics = [#tpu.dimension_semantics<parallel>], iteration_bounds = array<i64: 4>, scalar_prefetch = 0 : i64, scratch_operands = 1 : i64, tpu.core_type = #tpu.core_type<tc>, window_params = [{transform_indices = @transform_0, window_bounds = array<i64: 1, 8, 16>}, {transform_indices = @transform_1, window_bounds = array<i64: 1, 16, 8>}, {pipeline_mode = #tpu.pipeline_mode<synchronous>, transform_indices = @transform_2, window_bounds = array<i64: 16, 128>}, {transform_indices = @transform_3, window_bounds = array<i64: 1, 64, 8>}]} {
    %c0 = arith.constant 0 : index
    %c0_0 = arith.constant 0 : index
    %c0_1 = arith.constant 0 : index
    %0 = vector.load %arg1[%c0, %c0_0, %c0_1] : memref<1x8x16xbf16, #tpu.memory_space<vmem>>, vector<1x8x16xbf16>
    %1 = vector.shape_cast %0 : vector<1x8x16xbf16> to vector<8x16xbf16>
    %c0_2 = arith.constant 0 : index
    %c0_3 = arith.constant 0 : index
    %c0_4 = arith.constant 0 : index
    %2 = vector.load %arg2[%c0_2, %c0_3, %c0_4] : memref<1x16x8xbf16, #tpu.memory_space<vmem>>, vector<1x16x8xbf16>
    %3 = vector.shape_cast %2 : vector<1x16x8xbf16> to vector<16x8xbf16>
    %c0_5 = arith.constant 0 : index
    %c0_6 = arith.constant 0 : index
    %4 = vector.load %arg3[%c0_5, %c0_6] : memref<16x128xbf16, #tpu.memory_space<vmem>>, vector<16x128xbf16>
    %cst = arith.constant dense<0.000000e+00> : vector<8x128xf32>
    %5 = tpu.matmul %1, %4, %cst {dimension_numbers = #tpu.dot_dimension_numbers<[1], [0], [0], [1], [0, 0, 1, 1], [], []>} : vector<8x16xbf16>, vector<16x128xbf16>, vector<8x128xf32> -> vector<8x128xf32>
    %6 = vector.extract_strided_slice %5 {offsets = [0, 0], sizes = [8, 16], strides = [1, 1]} : vector<8x128xf32> to vector<8x16xf32>
    %c0_7 = arith.constant 0 : index
    %c0_8 = arith.constant 0 : index
    %7 = vector.load %arg5[%c0_7, %c0_8] : memref<64x16xf32, #tpu.memory_space<vmem>>, vector<8x16xf32>
    tpu.vector_store %arg5[%c0_7, %c0_8], %6 {strides = array<i32>} : memref<64x16xf32, #tpu.memory_space<vmem>>, vector<8x16xf32>,
    %8 = vector.extract_strided_slice %5 {offsets = [0, 16], sizes = [8, 16], strides = [1, 1]} : vector<8x128xf32> to vector<8x16xf32>
    %c8 = arith.constant 8 : index
    %c0_9 = arith.constant 0 : index
    %9 = vector.load %arg5[%c8, %c0_9] : memref<64x16xf32, #tpu.memory_space<vmem>>, vector<8x16xf32>
    tpu.vector_store %arg5[%c8, %c0_9], %8 {strides = array<i32>} : memref<64x16xf32, #tpu.memory_space<vmem>>, vector<8x16xf32>,
    %10 = vector.extract_strided_slice %5 {offsets = [0, 32], sizes = [8, 16], strides = [1, 1]} : vector<8x128xf32> to vector<8x16xf32>
    %c16 = arith.constant 16 : index
    %c0_10 = arith.constant 0 : index
    %11 = vector.load %arg5[%c16, %c0_10] : memref<64x16xf32, #tpu.memory_space<vmem>>, vector<8x16xf32>
    tpu.vector_store %arg5[%c16, %c0_10], %10 {strides = array<i32>} : memref<64x16xf32, #tpu.memory_space<vmem>>, vector<8x16xf32>,
    %12 = vector.extract_strided_slice %5 {offsets = [0, 48], sizes = [8, 16], strides = [1, 1]} : vector<8x128xf32> to vector<8x16xf32>
    %c24 = arith.constant 24 : index
    %c0_11 = arith.constant 0 : index
    %13 = vector.load %arg5[%c24, %c0_11] : memref<64x16xf32, #tpu.memory_space<vmem>>, vector<8x16xf32>
    tpu.vector_store %arg5[%c24, %c0_11], %12 {strides = array<i32>} : memref<64x16xf32, #tpu.memory_space<vmem>>, vector<8x16xf32>,
    %14 = vector.extract_strided_slice %5 {offsets = [0, 64], sizes = [8, 16], strides = [1, 1]} : vector<8x128xf32> to vector<8x16xf32>
    %c32 = arith.constant 32 : index
    %c0_12 = arith.constant 0 : index
    %15 = vector.load %arg5[%c32, %c0_12] : memref<64x16xf32, #tpu.memory_space<vmem>>, vector<8x16xf32>
    tpu.vector_store %arg5[%c32, %c0_12], %14 {strides = array<i32>} : memref<64x16xf32, #tpu.memory_space<vmem>>, vector<8x16xf32>,
    %16 = vector.extract_strided_slice %5 {offsets = [0, 80], sizes = [8, 16], strides = [1, 1]} : vector<8x128xf32> to vector<8x16xf32>
    %c40 = arith.constant 40 : index
    %c0_13 = arith.constant 0 : index
    %17 = vector.load %arg5[%c40, %c0_13] : memref<64x16xf32, #tpu.memory_space<vmem>>, vector<8x16xf32>
    tpu.vector_store %arg5[%c40, %c0_13], %16 {strides = array<i32>} : memref<64x16xf32, #tpu.memory_space<vmem>>, vector<8x16xf32>,
    %18 = vector.extract_strided_slice %5 {offsets = [0, 96], sizes = [8, 16], strides = [1, 1]} : vector<8x128xf32> to vector<8x16xf32>
    %c48 = arith.constant 48 : index
    %c0_14 = arith.constant 0 : index
    %19 = vector.load %arg5[%c48, %c0_14] : memref<64x16xf32, #tpu.memory_space<vmem>>, vector<8x16xf32>
    tpu.vector_store %arg5[%c48, %c0_14], %18 {strides = array<i32>} : memref<64x16xf32, #tpu.memory_space<vmem>>, vector<8x16xf32>,
    %20 = vector.extract_strided_slice %5 {offsets = [0, 112], sizes = [8, 16], strides = [1, 1]} : vector<8x128xf32> to vector<8x16xf32>
    %c56 = arith.constant 56 : index
    %c0_15 = arith.constant 0 : index
    %21 = vector.load %arg5[%c56, %c0_15] : memref<64x16xf32, #tpu.memory_space<vmem>>, vector<8x16xf32>
    tpu.vector_store %arg5[%c56, %c0_15], %20 {strides = array<i32>} : memref<64x16xf32, #tpu.memory_space<vmem>>, vector<8x16xf32>,
    %c0_16 = arith.constant 0 : index
    %c0_17 = arith.constant 0 : index
    %22 = vector.load %arg5[%c0_16, %c0_17] : memref<64x16xf32, #tpu.memory_space<vmem>>, vector<64x16xf32>
    %23 = arith.truncf %22 : vector<64x16xf32> to vector<64x16xbf16>
    %cst_18 = arith.constant dense<0.000000e+00> : vector<64x8xf32>
    %24 = tpu.matmul %23, %3, %cst_18 {dimension_numbers = #tpu.dot_dimension_numbers<[1], [0], [0], [1], [0, 0, 1, 1], [], []>} : vector<64x16xbf16>, vector<16x8xbf16>, vector<64x8xf32> -> vector<64x8xf32>
    %25 = vector.shape_cast %24 : vector<64x8xf32> to vector<1x64x8xf32>
    %c0_19 = arith.constant 0 : index
    %c0_20 = arith.constant 0 : index
    %c0_21 = arith.constant 0 : index
    %26 = vector.load %arg4[%c0_19, %c0_20, %c0_21] : memref<1x64x8xf32, #tpu.memory_space<vmem>>, vector<1x64x8xf32>
    tpu.vector_store %arg4[%c0_19, %c0_20, %c0_21], %25 {strides = array<i32>} : memref<1x64x8xf32, #tpu.memory_space<vmem>>, vector<1x64x8xf32>,
    return
  }
  func.func @transform_0(%arg0: i32) -> (i32, i32, i32) {
    %c0_i32 = arith.constant 0 : i32
    %c0_i32_0 = arith.constant 0 : i32
    %c0_i32_1 = arith.constant 0 : i32
    return %arg0, %c0_i32, %c0_i32_0 : i32, i32, i32
  }
  func.func @transform_1(%arg0: i32) -> (i32, i32, i32) {
    %c0_i32 = arith.constant 0 : i32
    %c0_i32_0 = arith.constant 0 : i32
    %c0_i32_1 = arith.constant 0 : i32
    return %arg0, %c0_i32, %c0_i32_0 : i32, i32, i32
  }
  func.func @transform_2(%arg0: i32) -> (i32, i32) {
    %c0_i32 = arith.constant 0 : i32
    %c0_i32_0 = arith.constant 0 : i32
    %c0_i32_1 = arith.constant 0 : i32
    return %c0_i32, %c0_i32_0 : i32, i32
  }
  func.func @transform_3(%arg0: i32) -> (i32, i32, i32) {
    %c0_i32 = arith.constant 0 : i32
    %c0_i32_0 = arith.constant 0 : i32
    %c0_i32_1 = arith.constant 0 : i32
    return %arg0, %c0_i32, %c0_i32_0 : i32, i32, i32
  }
}

</mosaic_0001>

<llo_original>
// kernel: tpu_custom_call.1
$region0: #{tpu_custom_call.1}
  #allocation0 [shape = 'u32[]', space=smem, size = 0x4, offset = 0x4, fixed_abs, tag = 'smem constant byte address 0x4 - core index']
  #allocation1 [shape = 'u32[144,128]{1,0:T(1,128)}', space=vmem, size = 0x12000, scoped, tag = 'internal scratch']
  #allocation2 [shape = 'f32[64,16]{1,0:T(8,128)}', space=vmem, size = 0x8000, scoped, tag = 'scratch operand']
  %s0 = inlined_call_operand.vmem [shape: bf16[4,8,16], index: 0, kind: input, shape index: {}]
  %s1 = inlined_call_operand.vmem [shape: bf16[4,16,8], index: 1, kind: input, shape index: {}]
  %s2 = inlined_call_operand.vmem [shape: bf16[16,128], index: 2, kind: input, shape index: {}]
  %s3 = inlined_call_operand.vmem [shape: f32[4,64,8], index: 3, kind: output, shape index: {}]
  %s4 = sld [smem:[#allocation0]]
  $region45: #{tpu_custom_call.1} parent=0
    _
  %s6 = ssub.s32 1, %s4
  %s7 = scalar_select 0, %s6, %s4
  loop: start=0, step=1, limit=6
  $region2: #{tpu_custom_call.1} parent=0 // loop_pre_header
    _
  $region3: #{tpu_custom_call.1} parent=0 // loop_header
    %s9 = sphi 0, %s13
    %p10 = scmp.ge.s32.totalorder %s9, 6
    %s19 = sphi 0, %s21
    %s22 = sphi 0, %s19
    %s23 = sphi 0, %s22
    %s39 = sphi 0, %s23
    %s45 = sphi 0, %s47
    %s48 = sphi 0, %s45
    %s49 = sphi 0, %s48
    %s65 = sphi 0, %s49
    %s69 = sphi 0, %s69
    %s71 = sphi 0, %s69
    %s72 = sphi 0, %s71
    %s86 = sphi 0, %s72
    %s92 = sphi 0, %s94
    %s95 = sphi 0, %s92
    %s96 = sphi 0, %s95
    %s112 = sphi 0, %s96
  $region4: #{tpu_custom_call.1} parent=0 // loop_header_branch
    %12 = sbr.rel (%p10) target = $region8
  $region5: #{tpu_custom_call.1} parent=0 // loop_body
    %s14 = ssub.s32 %s9, 1
    %s15 = ssub.s32 %s9, 2
    %s16 = sadd.s32 %s9, 1
    %s17 = ssub.s32 %s9, %s16
    %p18 = scmp.eq.s32.totalorder %s17, 0
    %s20 = sadd.s32 %s19, 1
    %s21 = scalar_select %p18, %s19, %s20
    %p24 = pneg %p18
    %p25 = scmp.eq.s32.totalorder %s9, 3
    %p26 = por %p24, %p25
    %p27 = scmp.ne.s32.totalorder %s19, %s22
    %p28 = scmp.eq.s32.totalorder %s9, 0
    %p29 = por %p27, %p28
    %p30 = scmp.ne.s32.totalorder %s19, %s22
    %p31 = scmp.eq.s32.totalorder %s14, 3
    %p32 = por %p30, %p31
    %p33 = scmp.ne.s32.totalorder %s22, %s23
    %p34 = scmp.eq.s32.totalorder %s14, 0
    %p35 = por %p33, %p34
    %p36 = scmp.ne.s32.totalorder %s22, %s23
    %p37 = scmp.eq.s32.totalorder %s15, 3
    %p38 = por %p36, %p37
    %p40 = scmp.ne.s32.totalorder %s23, %s39
    %p41 = scmp.eq.s32.totalorder %s15, 0
    %p42 = por %p40, %p41
    %s43 = ssub.s32 %s9, %s16
    %p44 = scmp.eq.s32.totalorder %s43, 0
    %s46 = sadd.s32 %s45, 1
    %s47 = scalar_select %p44, %s45, %s46
    %p50 = pneg %p44
    %p51 = scmp.eq.s32.totalorder %s9, 3
    %p52 = por %p50, %p51
    %p53 = scmp.ne.s32.totalorder %s45, %s48
    %p54 = scmp.eq.s32.totalorder %s9, 0
    %p55 = por %p53, %p54
    %p56 = scmp.ne.s32.totalorder %s45, %s48
    %p57 = scmp.eq.s32.totalorder %s14, 3
    %p58 = por %p56, %p57
    %p59 = scmp.ne.s32.totalorder %s48, %s49
    %p60 = scmp.eq.s32.totalorder %s14, 0
    %p61 = por %p59, %p60
    %p62 = scmp.ne.s32.totalorder %s48, %s49
    %p63 = scmp.eq.s32.totalorder %s15, 3
    %p64 = por %p62, %p63
    %p66 = scmp.ne.s32.totalorder %s49, %s65
    %p67 = scmp.eq.s32.totalorder %s15, 0
    %p68 = por %p66, %p67
    %s70 = sadd.s32 %s69, 1
    %p73 = scmp.eq.s32.totalorder %s9, 3
    %p74 = scmp.ne.s32.totalorder %s69, %s71
    %p75 = scmp.eq.s32.totalorder %s9, 0
    %p76 = por %p74, %p75
    %p77 = scmp.ne.s32.totalorder %s69, %s71
    %p78 = scmp.eq.s32.totalorder %s14, 3
    %p79 = por %p77, %p78
    %p80 = scmp.ne.s32.totalorder %s71, %s72
    %p81 = scmp.eq.s32.totalorder %s14, 0
    %p82 = por %p80, %p81
    %p83 = scmp.ne.s32.totalorder %s71, %s72
    %p84 = scmp.eq.s32.totalorder %s15, 3
    %p85 = por %p83, %p84
    %p87 = scmp.ne.s32.totalorder %s72, %s86
    %p88 = scmp.eq.s32.totalorder %s15, 0
    %p89 = por %p87, %p88
    %s90 = ssub.s32 %s9, %s16
    %p91 = scmp.eq.s32.totalorder %s90, 0
    %s93 = sadd.s32 %s92, 1
    %s94 = scalar_select %p91, %s92, %s93
    %p97 = pneg %p91
    %p98 = scmp.eq.s32.totalorder %s9, 3
    %p99 = por %p97, %p98
    %p100 = scmp.ne.s32.totalorder %s92, %s95
    %p101 = scmp.eq.s32.totalorder %s9, 0
    %p102 = por %p100, %p101
    %p103 = scmp.ne.s32.totalorder %s92, %s95
    %p104 = scmp.eq.s32.totalorder %s14, 3
    %p105 = por %p103, %p104
    %p106 = scmp.ne.s32.totalorder %s95, %s96
    %p107 = scmp.eq.s32.totalorder %s14, 0
    %p108 = por %p106, %p107
    %p109 = scmp.ne.s32.totalorder %s95, %s96
    %p110 = scmp.eq.s32.totalorder %s15, 3
    %p111 = por %p109, %p110
    %p113 = scmp.ne.s32.totalorder %s96, %s112
    %p114 = scmp.eq.s32.totalorder %s15, 0
    %p115 = por %p113, %p114
    %p116 = scmp.le.s32.totalorder 1, %s9
    %p117 = scmp.lt.s32.totalorder %s9, 5
    %p118 = pnand %p116, %p117
    %p119 = pneg %p118
    // Predicated region
    $region9: #{tpu_custom_call.1} parent=5 // pred_check
      _
    $region10: #{tpu_custom_call.1} parent=5 // pred_check_branch
      %121 = sbr.rel (%p118) target = $region12
    $region11: #{tpu_custom_call.1} parent=5 // pred_region
      %s122 = ssub.s32 %s9, 1
      // Predicated region
      $region13: #{tpu_custom_call.1} parent=11 // pred_check
        %p123 = pneg %p82
      $region14: #{tpu_custom_call.1} parent=11 // pred_check_branch
        %125 = sbr.rel (%p123) target = $region16
      $region15: #{tpu_custom_call.1} parent=11 // pred_region
        _
      $region16: #{tpu_custom_call.1} parent=11 // pred_fallthru
        _
    $region12: #{tpu_custom_call.1} parent=5 // pred_fallthru
      _
    %p126 = scmp.lt.s32.totalorder %s9, 4
    // Predicated region
    $region17: #{tpu_custom_call.1} parent=5 // pred_check
      %p127 = pneg %p126
    $region18: #{tpu_custom_call.1} parent=5 // pred_check_branch
      %129 = sbr.rel (%p127) target = $region20
    $region19: #{tpu_custom_call.1} parent=5 // pred_region
      // Predicated region
      $region21: #{tpu_custom_call.1} parent=19 // pred_check
        %p130 = pneg %p29
      $region22: #{tpu_custom_call.1} parent=19 // pred_check_branch
        %132 = sbr.rel (%p130) target = $region24
      $region23: #{tpu_custom_call.1} parent=19 // pred_region
        %p133 = scmp.lt.s32.totalorder %s9, 3
        %s134 = scalar_select %p133, %s9, 3
        %s135 = smul.addr %s134, 4
        %s136 = scalar_lea.vmem %s0, %s135
      $region24: #{tpu_custom_call.1} parent=19 // pred_fallthru
        _
      // Predicated region
      $region25: #{tpu_custom_call.1} parent=19 // pred_check
        %p137 = pneg %p55
      $region26: #{tpu_custom_call.1} parent=19 // pred_check_branch
        %139 = sbr.rel (%p137) target = $region28
      $region27: #{tpu_custom_call.1} parent=19 // pred_region
        %p140 = scmp.lt.s32.totalorder %s9, 3
        %s141 = scalar_select %p140, %s9, 3
        %s142 = smul.addr %s141, 2
        %s143 = smul.addr %s142, 4
        %s144 = scalar_lea.vmem %s1, %s143
      $region28: #{tpu_custom_call.1} parent=19 // pred_fallthru
        _
    $region20: #{tpu_custom_call.1} parent=5 // pred_fallthru
      _
    %p145 = scmp.le.s32.totalorder 1, %s9
    %p146 = scmp.lt.s32.totalorder %s9, 5
    %p147 = pnand %p145, %p146
    %p148 = pneg %p147
    // Predicated region
    $region29: #{tpu_custom_call.1} parent=5 // pred_check
      _
    $region30: #{tpu_custom_call.1} parent=5 // pred_check_branch
      %150 = sbr.rel (%p147) target = $region32
    $region31: #{tpu_custom_call.1} parent=5 // pred_region
      %s151 = ssub.s32 %s9, 1
      %p152 = scmp.lt.s32.totalorder %s14, 3
      %s153 = scalar_select %p152, %s14, 3
      %s154 = smul.addr %s153, 4
      %s155 = scalar_lea.vmem %s0, %s154
      %p156 = pneg %p35
      %p157 = pneg %p32
      %p158 = scmp.lt.s32.totalorder %s14, 3
      %s159 = scalar_select %p158, %s14, 3
      %s160 = smul.addr %s159, 2
      %s161 = smul.addr %s160, 4
      %s162 = scalar_lea.vmem %s1, %s161
      %p163 = pneg %p61
      %p164 = pneg %p58
      %p165 = pneg %p82
      %p166 = pneg %p79
      %p167 = pneg %p108
      %p168 = pneg %p105
      %p169 = scmp.lt.s32.totalorder %s14, 3
      %s170 = scalar_select %p169, %s14, 3
      %s171 = smul.addr %s170, 8
      %s172 = smul.addr %s171, 8
      %s173 = scalar_lea.vmem %s3, %s172
      %p174 = scmp.lt.s32.totalorder %s14, 3
      %s175 = scalar_select %p174, %s14, 3
      %s176 = smul.addr %s175, 4
      %s177 = scalar_lea.vmem %s0, %s176
      %p178 = scmp.lt.s32.totalorder %s14, 3
      %s179 = scalar_select %p178, %s14, 3
      %s180 = smul.addr %s179, 2
      %s181 = smul.addr %s180, 4
      %s182 = scalar_lea.vmem %s1, %s181
      %p183 = scmp.lt.s32.totalorder %s14, 3
      %s184 = scalar_select %p183, %s14, 3
      %s185 = smul.addr %s184, 8
      %s186 = smul.addr %s185, 8
      %s187 = scalar_lea.vmem %s3, %s186
      %v189 = vld [vmem:[%s177] sm:$0xf]
      %v190 = vld [vmem:[%s182] sm:$0xf]
      %v191 = vld [vmem:[%s182 + $0x4] sm:$0xf]
      %v192 = vld [vmem:[%s2] sm:$0xf]
      %v193 = vld [vmem:[%s2 + $0x4] sm:$0xf]
      %v196 = vunpack.c.l.b16 %v192
      %v197 = vunpack.c.l.b16 %v193
      %v198 = vpack.c.b16 %v197, %v196
      %vm200 = vcmask 130048
      %v202 = vsel %vm200, %v189, 0
      %204 = vmatprep.subr.bf16.mxu0 0
      %205 = vmatpush1.bf16.msra.mxu0 0
      %206 = vmatprep.subr.bf16.mxu0 0
      %207 = vmatpush1.bf16.msra.mxu0 0
      %208 = vmatprep.subr.bf16.mxu0 0
      %209 = vmatpush1.bf16.msra.mxu0 0
      %210 = vmatprep.subr.bf16.mxu0 0
      %211 = vmatpush1.bf16.msra.mxu0 0
      %212 = vmatprep.subr.bf16.mxu0 0
      %213 = vmatpush1.bf16.msra.mxu0 0
      %214 = vmatprep.subr.bf16.mxu0 0
      %215 = vmatpush1.bf16.msra.mxu0 0
      %216 = vmatprep.subr.bf16.mxu0 0
      %217 = vmatpush1.bf16.msra.mxu0 0
      %218 = vmatprep.subr.bf16.mxu0 0
      %219 = vmatpush1.bf16.msra.mxu0 %v198
      %220 = vmatprep.subr.bf16.mxu0 0
      %221 = vmatpush2.bf16.msra.mxu0 0
      %222 = vmatprep.subr.bf16.mxu0 0
      %223 = vmatpush2.bf16.msra.mxu0 0
      %224 = vmatprep.subr.bf16.mxu0 0
      %225 = vmatpush2.bf16.msra.mxu0 0
      %226 = vmatprep.subr.bf16.mxu0 0
      %227 = vmatpush2.bf16.msra.mxu0 0
      %228 = vmatprep.subr.bf16.mxu0 0
      %229 = vmatpush2.bf16.msra.mxu0 0
      %230 = vmatprep.subr.bf16.mxu0 0
      %231 = vmatpush2.bf16.msra.mxu0 0
      %232 = vmatprep.subr.bf16.mxu0 0
      %233 = vmatpush2.bf16.msra.mxu0 0
      %234 = vmatprep.subr.bf16.mxu0 0
      %235 = vmatpush2.bf16.msra.mxu0 0
      %236 = vmatprep.mubr.bf16.mxu0 0
      %237 = vmatmul.mubr.bf16.gmra.mxu0 %v202
      %v238 = vpop.f32.mrf.mxu0
      %v239 = vadd.f32 0.0, %v238
      %v240 = vpop.f32.mrf.mxu0
      %v241 = vpop.f32.mrf.mxu0
      %v242 = vpop.f32.mrf.mxu0
      %243 = vdwg.mxu0
      %244 = vst.msk [vmem:[#allocation2] sm:$0xff] %vm200, %v239
      %246 = vrot.lane.b32.xlu0 %v239, 112
      %v247 = vpop.permute.xlu0 %246
      %249 = vst.msk [vmem:[#allocation2 + $0x8] sm:$0xff] %vm200, %v247
      %250 = vrot.lane.b32.xlu0 %v239, 96
      %v251 = vpop.permute.xlu0 %250
      %253 = vst.msk [vmem:[#allocation2 + $0x10] sm:$0xff] %vm200, %v251
      %254 = vrot.lane.b32.xlu0 %v239, 80
      %v255 = vpop.permute.xlu0 %254
      %257 = vst.msk [vmem:[#allocation2 + $0x18] sm:$0xff] %vm200, %v255
      %258 = vrot.lane.b32.xlu0 %v239, 64
      %v259 = vpop.permute.xlu0 %258
      %261 = vst.msk [vmem:[#allocation2 + $0x20] sm:$0xff] %vm200, %v259
      %262 = vrot.lane.b32.xlu0 %v239, 48
      %v263 = vpop.permute.xlu0 %262
      %265 = vst.msk [vmem:[#allocation2 + $0x28] sm:$0xff] %vm200, %v263
      %266 = vrot.lane.b32.xlu0 %v239, 32
      %v267 = vpop.permute.xlu0 %266
      %269 = vst.msk [vmem:[#allocation2 + $0x30] sm:$0xff] %vm200, %v267
      %270 = vrot.lane.b32.xlu0 %v239, 16
      %v271 = vpop.permute.xlu0 %270
      %273 = vst.msk [vmem:[#allocation2 + $0x38] sm:$0xff] %vm200, %v271
      %v274 = vld [vmem:[#allocation2] sm:$0xff]
      %v275 = vld [vmem:[#allocation2 + $0x8] sm:$0xff]
      %v276 = vld [vmem:[#allocation2 + $0x10] sm:$0xff]
      %v277 = vld [vmem:[#allocation2 + $0x18] sm:$0xff]
      %v278 = vld [vmem:[#allocation2 + $0x20] sm:$0xff]
      %v279 = vld [vmem:[#allocation2 + $0x28] sm:$0xff]
      %v280 = vld [vmem:[#allocation2 + $0x30] sm:$0xff]
      %v281 = vld [vmem:[#allocation2 + $0x38] sm:$0xff]
      %v282 = vpack.c.bf16 %v275, %v274
      %v283 = vpack.c.bf16 %v277, %v276
      %v284 = vpack.c.bf16 %v279, %v278
      %v285 = vpack.c.bf16 %v281, %v280
      %v288 = vunpack.c.l.b16 %v190
      %v289 = vunpack.c.l.b16 %v191
      %v290 = vpack.c.b16 %v289, %v288
      %v293 = vsel %vm200, %v282, 0
      %v296 = vsel %vm200, %v283, 0
      %v299 = vsel %vm200, %v284, 0
      %v302 = vsel %vm200, %v285, 0
      %304 = vmatprep.subr.bf16.mxu0 0
      %305 = vmatpush1.bf16.msra.mxu0 0
      %306 = vmatprep.subr.bf16.mxu0 0
      %307 = vmatpush1.bf16.msra.mxu0 0
      %308 = vmatprep.subr.bf16.mxu0 0
      %309 = vmatpush1.bf16.msra.mxu0 0
      %310 = vmatprep.subr.bf16.mxu0 0
      %311 = vmatpush1.bf16.msra.mxu0 0
      %312 = vmatprep.subr.bf16.mxu0 0
      %313 = vmatpush1.bf16.msra.mxu0 0
      %314 = vmatprep.subr.bf16.mxu0 0
      %315 = vmatpush1.bf16.msra.mxu0 0
      %316 = vmatprep.subr.bf16.mxu0 0
      %317 = vmatpush1.bf16.msra.mxu0 0
      %318 = vmatprep.subr.bf16.mxu0 0
      %319 = vmatpush1.bf16.msra.mxu0 %v290
      %320 = vmatprep.subr.bf16.mxu0 0
      %321 = vmatpush2.bf16.msra.mxu0 0
      %322 = vmatprep.subr.bf16.mxu0 0
      %323 = vmatpush2.bf16.msra.mxu0 0
      %324 = vmatprep.subr.bf16.mxu0 0
      %325 = vmatpush2.bf16.msra.mxu0 0
      %326 = vmatprep.subr.bf16.mxu0 0
      %327 = vmatpush2.bf16.msra.mxu0 0
      %328 = vmatprep.subr.bf16.mxu0 0
      %329 = vmatpush2.bf16.msra.mxu0 0
      %330 = vmatprep.subr.bf16.mxu0 0
      %331 = vmatpush2.bf16.msra.mxu0 0
      %332 = vmatprep.subr.bf16.mxu0 0
      %333 = vmatpush2.bf16.msra.mxu0 0
      %334 = vmatprep.subr.bf16.mxu0 0
      %335 = vmatpush2.bf16.msra.mxu0 0
      %336 = vmatprep.mubr.bf16.mxu0 0
      %337 = vmatmul.mubr.bf16.gmra.mxu0 %v293
      %v338 = vpop.f32.mrf.mxu0
      %v339 = vadd.f32 0.0, %v338
      %v340 = vpop.f32.mrf.mxu0
      %v341 = vpop.f32.mrf.mxu0
      %v342 = vadd.f32 0.0, %v341
      %v343 = vpop.f32.mrf.mxu0
      %344 = vmatprep.mubr.bf16.mxu0 0
      %345 = vmatmul.mubr.bf16.gmra.mxu0 %v296
      %v346 = vpop.f32.mrf.mxu0
      %v347 = vadd.f32 0.0, %v346
      %v348 = vpop.f32.mrf.mxu0
      %v349 = vpop.f32.mrf.mxu0
      %v350 = vadd.f32 0.0, %v349
      %v351 = vpop.f32.mrf.mxu0
      %352 = vmatprep.mubr.bf16.mxu0 0
      %353 = vmatmul.mubr.bf16.gmra.mxu0 %v299
      %v354 = vpop.f32.mrf.mxu0
      %v355 = vadd.f32 0.0, %v354
      %v356 = vpop.f32.mrf.mxu0
      %v357 = vpop.f32.mrf.mxu0
      %v358 = vadd.f32 0.0, %v357
      %v359 = vpop.f32.mrf.mxu0
      %360 = vmatprep.mubr.bf16.mxu0 0
      %361 = vmatmul.mubr.bf16.gmra.mxu0 %v302
      %v362 = vpop.f32.mrf.mxu0
      %v363 = vadd.f32 0.0, %v362
      %v364 = vpop.f32.mrf.mxu0
      %v365 = vpop.f32.mrf.mxu0
      %v366 = vadd.f32 0.0, %v365
      %v367 = vpop.f32.mrf.mxu0
      %368 = vdwg.mxu0
      %vm369 = vcmask 64512
      %370 = vst.msk [vmem:[%s187] sm:$0xff] %vm369, %v339
      %371 = vst.msk [vmem:[%s187 + $0x8] sm:$0xff] %vm369, %v342
      %372 = vst.msk [vmem:[%s187 + $0x10] sm:$0xff] %vm369, %v347
      %373 = vst.msk [vmem:[%s187 + $0x18] sm:$0xff] %vm369, %v350
      %374 = vst.msk [vmem:[%s187 + $0x20] sm:$0xff] %vm369, %v355
      %375 = vst.msk [vmem:[%s187 + $0x28] sm:$0xff] %vm369, %v358
      %376 = vst.msk [vmem:[%s187 + $0x30] sm:$0xff] %vm369, %v363
      %377 = vst.msk [vmem:[%s187 + $0x38] sm:$0xff] %vm369, %v366
      %p378 = scmp.lt.s32.totalorder %s14, 3
      %s379 = scalar_select %p378, %s14, 3
      %s380 = smul.addr %s379, 8
      %s381 = smul.addr %s380, 8
      %s382 = scalar_lea.vmem %s3, %s381
      // Predicated region
      $region33: #{tpu_custom_call.1} parent=31 // pred_check
        %p383 = pneg %p105
      $region34: #{tpu_custom_call.1} parent=31 // pred_check_branch
        %385 = sbr.rel (%p383) target = $region36
      $region35: #{tpu_custom_call.1} parent=31 // pred_region
        _
      $region36: #{tpu_custom_call.1} parent=31 // pred_fallthru
        _
    $region32: #{tpu_custom_call.1} parent=5 // pred_fallthru
      _
    %p386 = scmp.le.s32.totalorder 2, %s9
    // Predicated region
    $region37: #{tpu_custom_call.1} parent=5 // pred_check
      %p387 = pneg %p386
    $region38: #{tpu_custom_call.1} parent=5 // pred_check_branch
      %389 = sbr.rel (%p387) target = $region40
    $region39: #{tpu_custom_call.1} parent=5 // pred_region
      %s390 = ssub.s32 %s9, 2
      // Predicated region
      $region41: #{tpu_custom_call.1} parent=39 // pred_check
        %p391 = pneg %p111
      $region42: #{tpu_custom_call.1} parent=39 // pred_check_branch
        %393 = sbr.rel (%p391) target = $region44
      $region43: #{tpu_custom_call.1} parent=39 // pred_region
        %p394 = scmp.lt.s32.totalorder %s15, 3
        %s395 = scalar_select %p394, %s15, 3
        %s396 = smul.addr %s395, 8
        %s397 = smul.addr %s396, 8
        %s398 = scalar_lea.vmem %s3, %s397
      $region44: #{tpu_custom_call.1} parent=39 // pred_fallthru
        _
    $region40: #{tpu_custom_call.1} parent=5 // pred_fallthru
      _
  $region6: #{tpu_custom_call.1} parent=0 // loop_footer
    %s13 = sadd.s32 1, %s9
  $region7: #{tpu_custom_call.1} parent=0 // loop_footer_branch
    %8 = sbr.rel target = $region3
  $region8: #{tpu_custom_call.1} parent=0 // loop_exit
    _

</llo_original>
